<compile_context>
chip_gen: v5e
topology: v5e:2x2
jax: 0.10.0
libtpu: 0.0.40
codegen_flags: <defaults>
</compile_context>

<pallas_src>
import functools
import numpy as np

import jax
import jax.numpy as jnp
from jax.experimental import pallas as pl
from jax.experimental.pallas import tpu as pltpu


def _round_up(x, m):
    return ((x + m - 1) // m) * m


# ----------------------------------------------------------------------------
# Pallas kernel 1: sigmoid focal classification loss (summed), tiled over rows
# ----------------------------------------------------------------------------
def _focal_sum_kernel(labels_ref, logits_ref, out_ref, *, alpha, num_real_classes):
    @pl.when(pl.program_id(0) == 0)
    def _init():
        out_ref[0, 0] = 0.0

    x = logits_ref[...].astype(jnp.float32)           # (TR, Cp)
    lab = labels_ref[...]                             # (TR, 1) int32; -1 marks row padding
    tr, cp = x.shape
    col = jax.lax.broadcasted_iota(jnp.int32, (tr, cp), 1)
    # one-hot built in-kernel; background label == num_classes never matches a
    # valid (< num_real_classes) column, which reproduces "drop last one-hot col".
    t = (col == lab).astype(jnp.float32)
    valid = jnp.logical_and(lab >= 0, col < num_real_classes).astype(jnp.float32)

    p = jax.nn.sigmoid(x)
    # numerically-stable BCE-with-logits
    ce = jnp.maximum(x, 0.0) - x * t + jnp.log1p(jnp.exp(-jnp.abs(x)))
    p_t = p * t + (1.0 - p) * (1.0 - t)
    mod = 1.0 - p_t
    loss = ce * (mod * mod)                           # gamma == 2 -> explicit square (VPU, not EUP pow)
    alpha_t = alpha * t + (1.0 - alpha) * (1.0 - t)
    loss = alpha_t * loss * valid
    out_ref[0, 0] += jnp.sum(loss)


def sigmoid_focal_loss_sum(logits_2d, labels_1d, alpha=0.25):
    """Sum over all real (row, class) entries of the sigmoid focal loss (gamma=2).

    logits_2d: [R, C] (native dtype); labels_1d: int [R]; a label value >= C
    (e.g. == num_classes) is background (all-zero one-hot row).
    """
    R, C = logits_2d.shape
    if R == 0:
        return jnp.float32(0.0)
    Cp = _round_up(C, 128)                            # lane-dense last dim
    TR = 256 if R >= 256 else _round_up(max(R, 1), 8)
    Rp = _round_up(R, TR)

    logits_p = logits_2d
    if (Rp, Cp) != (R, C):
        logits_p = jnp.zeros((Rp, Cp), logits_2d.dtype).at[:R, :C].set(logits_2d)
    labels_p = jnp.full((Rp, 1), -1, dtype=jnp.int32).at[:R, 0].set(
        jnp.asarray(labels_1d, dtype=jnp.int32))

    out = pl.pallas_call(
        functools.partial(_focal_sum_kernel, alpha=float(alpha),
                          num_real_classes=int(C)),
        out_shape=jax.ShapeDtypeStruct((1, 1), jnp.float32),
        grid=(Rp // TR,),
        in_specs=[pl.BlockSpec((TR, 1), lambda i: (i, 0)),
                  pl.BlockSpec((TR, Cp), lambda i: (i, 0))],
        out_specs=pl.BlockSpec(memory_space=pltpu.MemorySpace.SMEM),
        compiler_params=pltpu.CompilerParams(
            dimension_semantics=("arbitrary",)),      # row tiles are a reduction axis
    )(labels_p, logits_p)
    return out[0, 0]


# ----------------------------------------------------------------------------
# Pallas kernel 2: point-sampled mask losses (sigmoid-CE + dice), single block
# ----------------------------------------------------------------------------
def _mask_point_loss_kernel(logit_ref, label_ref, out_ref, *, num_rows, num_cols):
    x = logit_ref[...].astype(jnp.float32)            # (M8, Pp)
    t = label_ref[...].astype(jnp.float32)
    m8, pp = x.shape
    rmask = jax.lax.broadcasted_iota(jnp.int32, (m8, pp), 0) < num_rows
    cmask = jax.lax.broadcasted_iota(jnp.int32, (m8, pp), 1) < num_cols
    m = jnp.logical_and(rmask, cmask).astype(jnp.float32)

    ce = (jnp.maximum(x, 0.0) - x * t + jnp.log1p(jnp.exp(-jnp.abs(x)))) * m
    bce = jnp.sum(ce) * (1.0 / float(num_cols))       # == per-row mean over P, summed

    p = jax.nn.sigmoid(x) * m
    tm = t * m
    num = 2.0 * jnp.sum(p * tm, axis=1, keepdims=True)
    den = jnp.sum(p, axis=1, keepdims=True) + jnp.sum(tm, axis=1, keepdims=True)
    dice_row = 1.0 - (num + 1.0) * pl.reciprocal(den + 1.0, approx=True)
    rvalid = (jax.lax.broadcasted_iota(jnp.int32, (m8, 1), 0) < num_rows).astype(jnp.float32)
    dice = jnp.sum(dice_row * rvalid)

    out_ref[0] = bce
    out_ref[1] = dice


def mask_point_losses_sums(point_logits, point_labels):
    """Returns (sum of per-mask mean BCE, sum of per-mask dice loss)."""
    M, P = point_logits.shape
    M8 = _round_up(max(M, 1), 8)
    Pp = _round_up(P, 128)
    if (M8, Pp) != (M, P):
        logits_p = jnp.zeros((M8, Pp), point_logits.dtype).at[:M, :P].set(point_logits)
        labels_p = jnp.zeros((M8, Pp), point_labels.dtype).at[:M, :P].set(point_labels)
    else:
        logits_p, labels_p = point_logits, point_labels

    out = pl.pallas_call(
        functools.partial(_mask_point_loss_kernel, num_rows=int(M), num_cols=int(P)),
        out_shape=jax.ShapeDtypeStruct((2,), jnp.float32),
        in_specs=[pl.BlockSpec((M8, Pp), lambda: (0, 0)),
                  pl.BlockSpec((M8, Pp), lambda: (0, 0))],
        out_specs=pl.BlockSpec(memory_space=pltpu.MemorySpace.SMEM),
    )(logits_p, labels_p)
    return out[0], out[1]


# ----------------------------------------------------------------------------
# Box losses: M (= #matched boxes) is tiny, (M,4) is lane-sparse -> plain XLA
# ----------------------------------------------------------------------------
def _box_cxcywh_to_xyxy(b):
    cx, cy, w, h = b[..., 0], b[..., 1], b[..., 2], b[..., 3]
    return jnp.stack([cx - 0.5 * w, cy - 0.5 * h, cx + 0.5 * w, cy + 0.5 * h], axis=-1)


def box_losses_sums(src_boxes, tgt_boxes, eps=1e-7):
    s = src_boxes.astype(jnp.float32)
    t = tgt_boxes.astype(jnp.float32)
    l1 = jnp.sum(jnp.abs(s - t))
    sb = _box_cxcywh_to_xyxy(s)
    tb = _box_cxcywh_to_xyxy(t)
    area_s = (sb[:, 2] - sb[:, 0]) * (sb[:, 3] - sb[:, 1])
    area_t = (tb[:, 2] - tb[:, 0]) * (tb[:, 3] - tb[:, 1])
    iw = jnp.maximum(jnp.minimum(sb[:, 2], tb[:, 2]) - jnp.maximum(sb[:, 0], tb[:, 0]), 0.0)
    ih = jnp.maximum(jnp.minimum(sb[:, 3], tb[:, 3]) - jnp.maximum(sb[:, 1], tb[:, 1]), 0.0)
    inter = iw * ih
    union = area_s + area_t - inter
    iou = inter / jnp.maximum(union, eps)             # eps guard (degenerate boxes)
    cw = jnp.maximum(sb[:, 2], tb[:, 2]) - jnp.minimum(sb[:, 0], tb[:, 0])
    ch = jnp.maximum(sb[:, 3], tb[:, 3]) - jnp.minimum(sb[:, 1], tb[:, 1])
    c_area = cw * ch
    giou = iou - (c_area - union) / jnp.maximum(c_area, eps)
    return l1, jnp.sum(1.0 - giou)


# ----------------------------------------------------------------------------
# JAX glue: point sampling (grid_sample equivalent, align_corners=False).
# Bilinear gather is formulated as two separable one-hot weight matmuls so the
# contraction runs on the MXU (no take_along_axis dynamic-slices).
# ----------------------------------------------------------------------------
def point_sample(inputs, coords):
    """inputs: [M, C, H, W]; coords: [M, P, 2] in [0,1] (x, y). Returns [M, C, P]."""
    M, C, H, W = inputs.shape
    x = coords[..., 0] * W - 0.5
    y = coords[..., 1] * H - 0.5
    x0 = jnp.floor(x)
    y0 = jnp.floor(y)
    x1 = x0 + 1.0
    y1 = y0 + 1.0
    wx1 = x - x0
    wx0 = 1.0 - wx1
    wy1 = y - y0
    wy0 = 1.0 - wy1

    iw = jnp.arange(W, dtype=jnp.float32)[None, None, :]
    ih = jnp.arange(H, dtype=jnp.float32)[None, None, :]
    # Separable bilinear weights; out-of-range corners match nothing -> zero padding,
    # identical to grid_sample(padding_mode='zeros', align_corners=False).
    wx = (wx0[..., None] * (iw == x0[..., None]).astype(jnp.float32)
          + wx1[..., None] * (iw == x1[..., None]).astype(jnp.float32))   # [M, P, W]
    wy = (wy0[..., None] * (ih == y0[..., None]).astype(jnp.float32)
          + wy1[..., None] * (ih == y1[..., None]).astype(jnp.float32))   # [M, P, H]
    wx = wx.astype(inputs.dtype)
    wy = wy.astype(inputs.dtype)
    # MXU contractions: contract W, then H.
    tmp = jnp.einsum('mchw,mpw->mcph', inputs, wx,
                     preferred_element_type=jnp.float32)                  # [M, C, P, H]
    out = jnp.einsum('mcph,mph->mcp', tmp, wy,
                     preferred_element_type=jnp.float32)                  # [M, C, P]
    # TODO(synk): for production num_points, tile this inside a Pallas kernel
    # (scalar-prefetched point indices + DMA gather) to bound the weight-matrix memory.
    return out.astype(inputs.dtype)


def get_uncertain_point_coords_with_randomness(key, coarse_logits, num_points,
                                               oversample_ratio, importance_sample_ratio):
    M = coarse_logits.shape[0]
    num_sampled = int(num_points * oversample_ratio)
    k1, k2 = jax.random.split(key)
    point_coords = jax.random.uniform(k1, (M, num_sampled, 2), dtype=jnp.float32)
    point_logits = point_sample(coarse_logits, point_coords)        # [M, 1, S]
    uncertainty = -jnp.abs(point_logits)[:, 0, :]                   # calculate_uncertainty
    num_uncertain = int(importance_sample_ratio * num_points)
    num_random = num_points - num_uncertain
    idx = jax.lax.top_k(uncertainty, num_uncertain)[1]              # [M, num_uncertain]
    idx_e = jnp.broadcast_to(idx[:, :, None], (M, num_uncertain, 2))
    picked = jnp.take_along_axis(point_coords, idx_e, axis=1)
    if num_random > 0:
        rand_coords = jax.random.uniform(k2, (M, num_random, 2), dtype=jnp.float32)
        picked = jnp.concatenate([picked, rand_coords], axis=1)
    return picked


# ----------------------------------------------------------------------------
# Simple matcher (Hungarian replaced by greedy — see TODO)
# ----------------------------------------------------------------------------
def _box_cxcywh_to_xyxy_np(b):
    cx, cy, w, h = b[:, 0], b[:, 1], b[:, 2], b[:, 3]
    return np.stack([cx - 0.5 * w, cy - 0.5 * h, cx + 0.5 * w, cy + 0.5 * h], axis=-1)


def _generalized_box_iou_np(a, b):
    area_a = (a[:, 2] - a[:, 0]) * (a[:, 3] - a[:, 1])
    area_b = (b[:, 2] - b[:, 0]) * (b[:, 3] - b[:, 1])
    lt = np.maximum(a[:, None, :2], b[None, :, :2])
    rb = np.minimum(a[:, None, 2:], b[None, :, 2:])
    wh = np.clip(rb - lt, 0, None)
    inter = wh[..., 0] * wh[..., 1]
    union = area_a[:, None] + area_b[None, :] - inter
    iou = inter / np.maximum(union, 1e-7)
    lt_c = np.minimum(a[:, None, :2], b[None, :, :2])
    rb_c = np.maximum(a[:, None, 2:], b[None, :, 2:])
    wh_c = np.clip(rb_c - lt_c, 0, None)
    c = wh_c[..., 0] * wh_c[..., 1]
    return iou - (c - union) / np.maximum(c, 1e-7)


def _greedy_assign(cost):
    Q, N = cost.shape
    used = set()
    src, tgt = [], []
    for j in range(N):
        order = np.argsort(cost[:, j])
        for i in order:
            if int(i) not in used:
                used.add(int(i))
                src.append(int(i))
                tgt.append(j)
                break
    return np.array(src, dtype=np.int64), np.array(tgt, dtype=np.int64)


class SimpleMatcher:
    """Focal-class + L1-box + GIoU cost matcher with greedy assignment."""
    # TODO(synk): true Hungarian (scipy.linear_sum_assignment) has no Pallas/JAX
    # equivalent; greedy assignment used here.  Mask cost of the 'mask' match
    # term is also omitted.

    def __init__(self, cost_class=2.0, cost_bbox=5.0, cost_giou=2.0):
        self.cost_class = cost_class
        self.cost_bbox = cost_bbox
        self.cost_giou = cost_giou

    def __call__(self, outputs, targets, match_cost, extra=None):
        logits = np.asarray(jax.device_get(outputs['pred_logits']))
        boxes = np.asarray(jax.device_get(outputs['pred_boxes']))
        alpha, gamma = 0.25, 2.0
        indices = []
        for b, t in enumerate(targets):
            tgt_labels = np.asarray(t['labels'])
            tgt_boxes = np.asarray(jax.device_get(t['boxes']))
            prob = 1.0 / (1.0 + np.exp(-logits[b]))
            neg = (1 - alpha) * (prob ** gamma) * (-np.log(1 - prob + 1e-8))
            pos = alpha * ((1 - prob) ** gamma) * (-np.log(prob + 1e-8))
            cost = self.cost_class * (pos[:, tgt_labels] - neg[:, tgt_labels])
            if 'box' in match_cost:
                cost_bbox = np.abs(boxes[b][:, None, :] - tgt_boxes[None, :, :]).sum(-1)
                cost_giou = -_generalized_box_iou_np(_box_cxcywh_to_xyxy_np(boxes[b]),
                                                     _box_cxcywh_to_xyxy_np(tgt_boxes))
                cost = cost + self.cost_bbox * cost_bbox + self.cost_giou * cost_giou
            indices.append(_greedy_assign(cost))
        return indices


# ----------------------------------------------------------------------------
# Criterion
# ----------------------------------------------------------------------------
class SetCriterionVisualOpenSet:
    def __init__(self, num_classes, matcher, weight_dict, eos_coef, top_x_layers, losses,
                 num_points, oversample_ratio, importance_sample_ratio, grounding_weight,
                 dn='no', dn_losses=(), panoptic_on=False, semantic_ce_loss=False):
        self.num_classes = num_classes
        self.matcher = matcher
        self.weight_dict = weight_dict
        self.eos_coef = eos_coef
        self.top_x_layers = top_x_layers
        self.losses = losses
        self.dn = dn
        self.dn_losses = list(dn_losses)
        # deterministic parameter init (buffer from __init__)
        self.empty_weight = jnp.ones(num_classes + 1, dtype=jnp.float32).at[-1].set(eos_coef)
        self.num_points = num_points
        self.oversample_ratio = oversample_ratio
        self.importance_sample_ratio = importance_sample_ratio
        self.focal_alpha = 0.25
        self.panoptic_on = panoptic_on
        self.semantic_ce_loss = semantic_ce_loss
        self.grounding_weight = grounding_weight
        self.prediction_switch = None
        self._point_key = jax.random.PRNGKey(1234)

    # ----- index helpers -----
    def _get_src_permutation_idx(self, indices):
        batch_idx = np.concatenate([np.full_like(src, i) for i, (src, _) in enumerate(indices)])
        src_idx = np.concatenate([src for src, _ in indices])
        return batch_idx, src_idx

    def _get_tgt_permutation_idx(self, indices):
        batch_idx = np.concatenate([np.full_like(tgt, i) for i, (_, tgt) in enumerate(indices)])
        tgt_idx = np.concatenate([tgt for _, tgt in indices])
        return batch_idx, tgt_idx

    # ----- losses -----
    def loss_labels(self, outputs, targets, indices, num_boxes, layer_id=None, log=True,
                    key='gt_whole_classes', extra=None):
        if self.prediction_switch is None or 'whole' not in self.prediction_switch:
            if 'labels' in targets[0]:
                key = 'labels'
        elif not self.prediction_switch['whole']:
            return {'fake_no_loss_mask_cls_0': 0.0}
        elif key not in targets[0] or targets[0].get('fake', False):
            return {'loss_mask_cls_0': 0.0 * jnp.sum(outputs['pred_logits'])}

        src_logits = outputs['pred_logits']
        B, Q, C = src_logits.shape
        batch_idx, src_idx = self._get_src_permutation_idx(indices)
        target_classes_o = np.concatenate(
            [np.asarray(t[key])[np.asarray(J)] for t, (_, J) in zip(targets, indices)])
        target_classes = np.full((B, Q), self.num_classes, dtype=np.int32)
        target_classes[batch_idx, src_idx] = target_classes_o
        # sigmoid_focal_loss(...).mean(1).sum()/num_boxes * Q  ==  sum(loss)/num_boxes
        total = sigmoid_focal_loss_sum(src_logits.reshape(B * Q, C),
                                       target_classes.reshape(-1),
                                       alpha=self.focal_alpha)
        return {'loss_mask_cls_0': total / num_boxes}

    def loss_labels_masked(self, outputs, targets, indices, num_boxes, log=True,
                           layer_id=None, extra=None):
        if indices is None or len(targets) == 0:
            return {'loss_mask_cls_0': jnp.sum(outputs['pred_logits']) * 0.0}
        src_logits = outputs['pred_logits']
        B, Q, C = src_logits.shape
        batch_idx, src_idx = self._get_src_permutation_idx(indices)
        target_classes_o = np.concatenate(
            [np.asarray(t['labels'])[np.asarray(J)] for t, (_, J) in zip(targets, indices)])
        sel_logits = src_logits[batch_idx, src_idx]            # [M, C]
        total = sigmoid_focal_loss_sum(sel_logits, target_classes_o, alpha=self.focal_alpha)
        # reference: sigmoid_focal_loss(x[M,C]).mean(1).sum() / num_boxes * Q == sum/C/num_boxes*Q
        loss_ce = total / C / num_boxes * Q
        return {'loss_mask_cls_0': loss_ce}

    def loss_boxes(self, outputs, targets, indices, num_boxes, layer_id=None, extra=None):
        if indices is None or len(targets) == 0 or targets[0].get('fake', False):
            loss = jnp.sum(outputs['pred_boxes']) * 0.0
            return {'loss_bbox_0': loss, 'loss_giou_0': loss}
        batch_idx, src_idx = self._get_src_permutation_idx(indices)
        src_boxes = outputs['pred_boxes'][batch_idx, src_idx]
        target_boxes = jnp.concatenate(
            [t['boxes'][np.asarray(i)] for t, (_, i) in zip(targets, indices)], axis=0)
        l1_sum, giou_sum = box_losses_sums(src_boxes, target_boxes)
        return {'loss_bbox_0': l1_sum / num_boxes, 'loss_giou_0': giou_sum / num_boxes}

    def loss_masks(self, outputs, targets, indices, num_masks, layer_id=None, extra=None):
        if indices is None or len(targets) == 0 or targets[0].get('fake', False):
            loss = jnp.sum(outputs['pred_masks']) * 0.0
            return {'loss_mask_bce_0': loss, 'loss_mask_dice_0': loss}
        src_b, src_i = self._get_src_permutation_idx(indices)
        src_masks = outputs['pred_masks'][src_b, src_i]                     # [M, H, W]
        target_masks = jnp.concatenate(
            [t['masks'][np.asarray(i)] for t, (_, i) in zip(targets, indices)],
            axis=0).astype(src_masks.dtype)                                 # [M, Ht, Wt]
        src_masks = src_masks[:, None]
        target_masks = target_masks[:, None]
        # fresh randoms each call (split, don't reuse, the PRNG key)
        self._point_key, point_key = jax.random.split(self._point_key)
        point_coords = get_uncertain_point_coords_with_randomness(
            point_key, src_masks.astype(jnp.float32),
            self.num_points, self.oversample_ratio, self.importance_sample_ratio)
        point_labels = point_sample(target_masks, point_coords)[:, 0, :]
        point_logits = point_sample(src_masks, point_coords)[:, 0, :]
        bce_sum, dice_sum = mask_point_losses_sums(point_logits, point_labels)
        return {'loss_mask_bce_0': bce_sum / num_masks,
                'loss_mask_dice_0': dice_sum / num_masks}

    def get_loss(self, loss, outputs, targets, indices, num_masks=None, layer_id=None, extra=None):
        loss_map = {'labels': self.loss_labels, 'dn_labels': self.loss_labels_masked,
                    'masks': self.loss_masks, 'boxes': self.loss_boxes}
        assert loss in loss_map, f'do you really want to compute {loss} loss?'
        return loss_map[loss](outputs, targets, indices, num_masks, layer_id=layer_id, extra=extra)

    # ----- forward -----
    def forward(self, outputs, targets_all, mask_dict=None, extra=None, task='seg'):
        self.prediction_switch = extra
        outputs_without_aux = {k: v for k, v in outputs.items() if k != 'aux_outputs'}
        match_cost = ['cls', 'box', 'mask']
        if task == 'det' or task == 'seg_from_teacher':
            match_cost = ['cls', 'box']
        targets = targets_all['generic']
        if mask_dict is not None and 'num_class' in targets[0]:
            self.num_classes = targets[0]['num_class']
        indices = (self.matcher(outputs_without_aux, targets, match_cost, extra=extra)
                   if not targets[0].get('fake', False) else None)
        num_masks = sum(len(t['labels']) for t in targets)
        num_masks = max(float(num_masks), 1.0)   # clamp(min=1), world_size=1
        losses = {}
        for loss in self.losses:
            if task == 'det' and loss == 'masks':
                continue
            losses.update(self.get_loss(loss, outputs, targets, indices, num_masks,
                                        layer_id=0, extra=extra))
        # TODO(synk): dn branches, aux_outputs / interm_outputs layers and the
        # distributed all_reduce of num_masks are not exercised in this setting.
        return losses

    __call__ = forward


# ----------------------------------------------------------------------------
# main
# ----------------------------------------------------------------------------
if __name__ == "__main__":
    key = jax.random.PRNGKey(0)
    ks = jax.random.split(key, 12)

    B, Q, C = 2, 8, 16          # batch, queries, classes
    H, W = 16, 16               # predicted mask resolution
    Ht, Wt = 32, 32             # target mask resolution
    N_OBJ = 3                   # objects per image

    pred_logits = jax.random.normal(ks[0], (B, Q, C), dtype=jnp.float32)
    pred_boxes = jax.nn.sigmoid(jax.random.normal(ks[1], (B, Q, 4), dtype=jnp.float32))
    pred_masks = jax.random.normal(ks[2], (B, Q, H, W), dtype=jnp.float32)

    outputs = {'pred_logits': pred_logits, 'pred_boxes': pred_boxes, 'pred_masks': pred_masks}

    targets = []
    for b in range(B):
        labels = np.asarray(jax.device_get(
            jax.random.randint(ks[3 + b], (N_OBJ,), 0, C))).astype(np.int64)
        cxcy = jax.random.uniform(ks[5 + b], (N_OBJ, 2), minval=0.3, maxval=0.7)
        wh = jax.random.uniform(ks[7 + b], (N_OBJ, 2), minval=0.1, maxval=0.3)
        boxes = jnp.concatenate([cxcy, wh], axis=1).astype(jnp.float32)
        masks = (jax.random.uniform(ks[9 + b], (N_OBJ, Ht, Wt)) > 0.5).astype(jnp.float32)
        targets.append({'labels': labels, 'boxes': boxes, 'masks': masks})

    criterion = SetCriterionVisualOpenSet(
        num_classes=C,
        matcher=SimpleMatcher(),
        weight_dict={'loss_mask_cls_0': 4.0, 'loss_bbox_0': 5.0, 'loss_giou_0': 2.0,
                     'loss_mask_bce_0': 5.0, 'loss_mask_dice_0': 5.0},
        eos_coef=0.1,
        top_x_layers={'mask': 9, 'box': 9, 'class': 9},
        losses=['labels', 'boxes', 'masks'],
        num_points=128,
        oversample_ratio=3.0,
        importance_sample_ratio=0.75,
        grounding_weight=1.0,
        dn='no',
        dn_losses=[],
    )

    losses = criterion(outputs, {'generic': targets}, mask_dict=None, extra=None, task='seg')
    losses = jax.block_until_ready(losses)

    for k, v in losses.items():
        val = float(np.asarray(v))
        assert np.isfinite(val), f"non-finite loss {k}={val}"

    print("KERNEL_OK")
</pallas_src>

<mosaic_0001>
module attributes {stable_mosaic.version = 11 : i64} {
  func.func @_focal_sum_kernel(%arg0: i32, %arg1: memref<16x1xi32, #tpu.memory_space<vmem>>, %arg2: memref<16x128xf32, #tpu.memory_space<vmem>>, %arg3: memref<1x1xf32, #tpu.memory_space<smem>>) attributes {dimension_semantics = [#tpu.dimension_semantics<arbitrary>], iteration_bounds = array<i64: 1>, scalar_prefetch = 0 : i64, scratch_operands = 0 : i64, tpu.core_type = #tpu.core_type<tc>, window_params = [{transform_indices = @transform_0, window_bounds = array<i64: 16, 1>}, {transform_indices = @transform_1, window_bounds = array<i64: 16, 128>}, {transform_indices = @transform_2, window_bounds = array<i64: 1, 1>}]} {
    %c0_i32 = arith.constant 0 : i32
    %0 = arith.cmpi eq, %arg0, %c0_i32 : i32
    %1 = arith.extui %0 : i1 to i32
    %c0_i32_0 = arith.constant 0 : i32
    %2 = arith.cmpi ne, %1, %c0_i32_0 : i32
    scf.if %2 {
      %cst_18 = arith.constant 0.000000e+00 : f32
      %c0_19 = arith.constant 0 : index
      %c0_20 = arith.constant 0 : index
      %60 = memref.load %arg3[%c0_19, %c0_20] : memref<1x1xf32, #tpu.memory_space<smem>>
      memref.store %cst_18, %arg3[%c0_19, %c0_20] : memref<1x1xf32, #tpu.memory_space<smem>>
    } else {
    }
    %c0 = arith.constant 0 : index
    %c0_1 = arith.constant 0 : index
    %3 = vector.load %arg2[%c0, %c0_1] : memref<16x128xf32, #tpu.memory_space<vmem>>, vector<16x128xf32>
    %c0_2 = arith.constant 0 : index
    %c0_3 = arith.constant 0 : index
    %4 = vector.load %arg1[%c0_2, %c0_3] : memref<16x1xi32, #tpu.memory_space<vmem>>, vector<16x1xi32>
    %5 = tpu.iota {dimensions = array<i32: 1>} : vector<16x128xi32>
    %6 = vector.broadcast %4 : vector<16x1xi32> to vector<16x128xi32>
    %7 = arith.cmpi eq, %5, %6 : vector<16x128xi32>
    %8 = arith.extui %7 : vector<16x128xi1> to vector<16x128xi32>
    %9 = arith.sitofp %8 : vector<16x128xi32> to vector<16x128xf32>
    %c0_i32_4 = arith.constant 0 : i32
    %10 = vector.broadcast %c0_i32_4 : i32 to vector<16x1xi32>
    %11 = arith.cmpi sge, %4, %10 : vector<16x1xi32>
    %c16_i32 = arith.constant 16 : i32
    %12 = vector.broadcast %c16_i32 : i32 to vector<16x128xi32>
    %13 = arith.cmpi slt, %5, %12 : vector<16x128xi32>
    %14 = vector.broadcast %11 : vector<16x1xi1> to vector<16x128xi1>
    %15 = arith.andi %14, %13 : vector<16x128xi1>
    %16 = arith.extui %15 : vector<16x128xi1> to vector<16x128xi32>
    %17 = arith.sitofp %16 : vector<16x128xi32> to vector<16x128xf32>
    %18 = arith.negf %3 : vector<16x128xf32>
    %19 = math.exp %18 : vector<16x128xf32>
    %cst = arith.constant 1.000000e+00 : f32
    %20 = vector.broadcast %cst : f32 to vector<16x128xf32>
    %21 = arith.addf %20, %19 : vector<16x128xf32>
    %22 = arith.divf %20, %21 : vector<16x128xf32>
    %cst_5 = arith.constant 0.000000e+00 : f32
    %23 = vector.broadcast %cst_5 : f32 to vector<16x128xf32>
    %24 = arith.maximumf %3, %23 : vector<16x128xf32>
    %25 = arith.mulf %3, %9 : vector<16x128xf32>
    %26 = arith.subf %24, %25 : vector<16x128xf32>
    %27 = math.absf %3 : vector<16x128xf32>
    %cst_6 = arith.constant 0.000000e+00 : f32
    %28 = vector.broadcast %cst_6 : f32 to vector<16x128xf32>
    %29 = arith.subf %28, %27 : vector<16x128xf32>
    %30 = math.exp %29 : vector<16x128xf32>
    %31 = math.log1p %30 : vector<16x128xf32>
    %32 = arith.addf %26, %31 : vector<16x128xf32>
    %33 = arith.mulf %22, %9 : vector<16x128xf32>
    %cst_7 = arith.constant 1.000000e+00 : f32
    %34 = vector.broadcast %cst_7 : f32 to vector<16x128xf32>
    %35 = arith.subf %34, %22 : vector<16x128xf32>
    %cst_8 = arith.constant 1.000000e+00 : f32
    %36 = vector.broadcast %cst_8 : f32 to vector<16x128xf32>
    %37 = arith.subf %36, %9 : vector<16x128xf32>
    %38 = arith.mulf %35, %37 : vector<16x128xf32>
    %39 = arith.addf %33, %38 : vector<16x128xf32>
    %cst_9 = arith.constant 1.000000e+00 : f32
    %40 = vector.broadcast %cst_9 : f32 to vector<16x128xf32>
    %41 = arith.subf %40, %39 : vector<16x128xf32>
    %42 = arith.mulf %41, %41 : vector<16x128xf32>
    %43 = arith.mulf %32, %42 : vector<16x128xf32>
    %cst_10 = arith.constant 2.500000e-01 : f32
    %44 = vector.broadcast %cst_10 : f32 to vector<16x128xf32>
    %45 = arith.mulf %44, %9 : vector<16x128xf32>
    %cst_11 = arith.constant 1.000000e+00 : f32
    %46 = vector.broadcast %cst_11 : f32 to vector<16x128xf32>
    %47 = arith.subf %46, %9 : vector<16x128xf32>
    %cst_12 = arith.constant 7.500000e-01 : f32
    %48 = vector.broadcast %cst_12 : f32 to vector<16x128xf32>
    %49 = arith.mulf %48, %47 : vector<16x128xf32>
    %50 = arith.addf %45, %49 : vector<16x128xf32>
    %51 = arith.mulf %50, %43 : vector<16x128xf32>
    %52 = arith.mulf %51, %17 : vector<16x128xf32>
    %c0_13 = arith.constant 0 : index
    %c0_14 = arith.constant 0 : index
    %53 = memref.load %arg3[%c0_13, %c0_14] : memref<1x1xf32, #tpu.memory_space<smem>>
    %54 = vector.shape_cast %52 : vector<16x128xf32> to vector<1x16x128xf32>
    %cst_15 = arith.constant dense<0.000000e+00> : vector<1xf32>
    %55 = vector.multi_reduction <add>, %54, %cst_15 [1, 2] : vector<1x16x128xf32> to vector<1xf32>
    %56 = vector.shape_cast %55 : vector<1xf32> to vector<1x1x1xf32>
    %57 = vector.extract %56[0, 0, 0] : f32 from vector<1x1x1xf32>
    %58 = arith.addf %53, %57 : f32
    %c0_16 = arith.constant 0 : index
    %c0_17 = arith.constant 0 : index
    %59 = memref.load %arg3[%c0_16, %c0_17] : memref<1x1xf32, #tpu.memory_space<smem>>
    memref.store %58, %arg3[%c0_16, %c0_17] : memref<1x1xf32, #tpu.memory_space<smem>>
    return
  }
  func.func @transform_0(%arg0: i32) -> (i32, i32) {
    %c0_i32 = arith.constant 0 : i32
    %c0_i32_0 = arith.constant 0 : i32
    return %arg0, %c0_i32 : i32, i32
  }
  func.func @transform_1(%arg0: i32) -> (i32, i32) {
    %c0_i32 = arith.constant 0 : i32
    %c0_i32_0 = arith.constant 0 : i32
    return %arg0, %c0_i32 : i32, i32
  }
  func.func @transform_2(%arg0: i32) -> (i32, i32) {
    %c0_i32 = arith.constant 0 : i32
    %c0_i32_0 = arith.constant 0 : i32
    %c0_i32_1 = arith.constant 0 : i32
    return %c0_i32, %c0_i32_0 : i32, i32
  }
}

</mosaic_0001>

<llo_original>
// kernel: tpu_custom_call.1
$region0: #{tpu_custom_call.1}
  #allocation0 [shape = 'u32[]', space=smem, size = 0x4, offset = 0x4, fixed_abs, tag = 'smem constant byte address 0x4 - core index']
  #allocation1 [shape = 'u32[72,128]{1,0:T(1,128)}', space=vmem, size = 0x9000, scoped, tag = 'internal scratch']
  %s0 = inlined_call_operand.vmem [shape: s32[16,1], index: 0, kind: input, shape index: {}]
  %s1 = inlined_call_operand.vmem [shape: f32[16,128], index: 1, kind: input, shape index: {}]
  %s2 = inlined_call_operand.hbm [shape: f32[1,1], index: 2, kind: output, shape index: {}]
  %s3 = sld [smem:[#allocation0]]
  $region22: #{tpu_custom_call.1} parent=0
    _
  %s5 = ssub.s32 1, %s3
  %s6 = scalar_select 0, %s5, %s3
  $region1: #{tpu_custom_call.1} parent=0
    #allocation2 [shape = 'u8[512]{0}', space=smem, size = 0x200, scoped, tag = 'output window, operand 0, single buffered']
    #allocation3 [shape = 's32[1]{0}', space=sflag, size = 0x4, scoped, tag = 'scoped memory for tpu_custom_call.1']
    %7 = vsyncpa [#allocation3], 0
    // Predicated region
    $region2: #{tpu_custom_call.1} parent=1 // pred_check
      _
    $region3: #{tpu_custom_call.1} parent=1 // pred_check_branch
      %9 = sbr.rel (0) target = $region5
    $region4: #{tpu_custom_call.1} parent=1 // pred_region
      _
    $region5: #{tpu_custom_call.1} parent=1 // pred_fallthru
      _
    // Predicated region
    $region6: #{tpu_custom_call.1} parent=1 // pred_check
      _
    $region7: #{tpu_custom_call.1} parent=1 // pred_check_branch
      %11 = sbr.rel (0) target = $region9
    $region8: #{tpu_custom_call.1} parent=1 // pred_region
      _
    $region9: #{tpu_custom_call.1} parent=1 // pred_fallthru
      _
    %p12 = scmp.eq.s32.totalorder 0, 0
    // Predicated region
    $region10: #{tpu_custom_call.1} parent=1 // pred_check
      %p13 = pneg %p12
    $region11: #{tpu_custom_call.1} parent=1 // pred_check_branch
      %15 = sbr.rel (%p13) target = $region13
    $region12: #{tpu_custom_call.1} parent=1 // pred_region
      %s16 = scalar_lea.smem [#allocation2], 0
      %17 = sst [smem:[%s16]] 0.0
    $region13: #{tpu_custom_call.1} parent=1 // pred_fallthru
      _
    %v18 = vld [vmem:[%s1] sm:$0xff]
    %v19 = vld [vmem:[%s1 + $0x8] sm:$0xff]
    %v20 = vld [vmem:[%s0] sm:$0xff]
    %v21 = vld [vmem:[%s0 + $0x8] sm:$0xff]
    %v22 = vlaneseq
    %v23 = vand.u32 %v22, 127
    %24 = vset.pattern.permute.xlu0 0
    %25 = vperm.xlu0 %24, %v20
    %v26 = vpop.permute.xlu0 %25
    %27 = vset.pattern.permute.xlu0 0
    %28 = vperm.xlu0 %27, %v21
    %v29 = vpop.permute.xlu0 %28
    %vm30 = vcmp.eq.s32.totalorder %v23, %v26
    %vm31 = vcmp.eq.s32.totalorder %v23, %v29
    %v32 = vsel %vm30, 1, 0
    %v33 = vsel %vm31, 1, 0
    %v34 = vcvt.s32.f32 %v32
    %v35 = vcvt.s32.f32 %v33
    %vm36 = vcmp.ge.s32.totalorder %v20, 0
    %vm37 = vcmp.ge.s32.totalorder %v21, 0
    %vm38 = vcmp.lt.s32.totalorder %v23, 16
    %v39 = vsel %vm36, 1, 0
    %v40 = vsel %vm37, 1, 0
    %41 = vset.pattern.permute.xlu0 0
    %42 = vperm.xlu0 %41, %v39
    %v43 = vpop.permute.xlu0 %42
    %44 = vset.pattern.permute.xlu0 0
    %45 = vperm.xlu0 %44, %v40
    %v46 = vpop.permute.xlu0 %45
    %vm47 = vcmp.eq.s32.totalorder %v43, 1
    %vm48 = vcmp.eq.s32.totalorder %v46, 1
    %vm49 = vmand %vm47, %vm38
    %vm50 = vmand %vm48, %vm38
    %v51 = vsel %vm49, 1, 0
    %v52 = vsel %vm50, 1, 0
    %v53 = vcvt.s32.f32 %v51
    %v54 = vcvt.s32.f32 %v52
    %v55 = vxor.u32 %v18, 2147483648
    %v56 = vxor.u32 %v19, 2147483648
    %v57 = vmul.f32 %v55, 1.442695
    %v58 = vpow.pop %v57
    %v59 = vmul.f32 %v56, 1.442695
    %v60 = vpow.pop %v59
    %v61 = vadd.f32 %v58, 1.0
    %v62 = vadd.f32 %v60, 1.0
    %v63 = vrcp.pop %v61
    %v64 = vmul.f32 %v61, %v63
    %v65 = vsub.f32 1.0, %v64
    %v66 = vmul.f32 %v63, %v65
    %v67 = vadd.f32 %v63, %v66
    %vm68 = vweird.f32 %v61
    %vm69 = vweird.f32 %v63
    %vm70 = vmor %vm68, %vm69
    %v71 = vsel %vm70, %v63, %v67
    %v72 = vand.u32 2147483647, %v61
    %vm73 = vcmp.eq.f32.partialorder %v72, 8.507059e+37
    %v74 = vand.u32 %v61, 2147483648
    %v75 = vor.u32 1.1754944e-38, %v74
    %v76 = vsel %vm73, %v75, %v71
    %v77 = vmul.f32 1.0, %v76
    %v78 = vrcp.pop %v62
    %v79 = vmul.f32 %v62, %v78
    %v80 = vsub.f32 1.0, %v79
    %v81 = vmul.f32 %v78, %v80
    %v82 = vadd.f32 %v78, %v81
    %vm83 = vweird.f32 %v62
    %vm84 = vweird.f32 %v78
    %vm85 = vmor %vm83, %vm84
    %v86 = vsel %vm85, %v78, %v82
    %v87 = vand.u32 2147483647, %v62
    %vm88 = vcmp.eq.f32.partialorder %v87, 8.507059e+37
    %v89 = vand.u32 %v62, 2147483648
    %v90 = vor.u32 1.1754944e-38, %v89
    %v91 = vsel %vm88, %v90, %v86
    %v92 = vmul.f32 1.0, %v91
    %v93 = vmax.f32 %v18, 0.0
    %v94 = vmax.f32 %v19, 0.0
    %v95 = vmul.f32 %v18, %v34
    %v96 = vmul.f32 %v19, %v35
    %v97 = vsub.f32 %v93, %v95
    %v98 = vsub.f32 %v94, %v96
    %v99 = vand.u32 2147483647, %v18
    %v100 = vand.u32 2147483647, %v19
    %v101 = vsub.f32 0.0, %v99
    %v102 = vsub.f32 0.0, %v100
    %v103 = vmul.f32 %v101, 1.442695
    %v104 = vpow.pop %v103
    %v105 = vmul.f32 %v102, 1.442695
    %v106 = vpow.pop %v105
    %v107 = vadd.f32 %v104, 1.0
    %v108 = vlog2.pop %v107
    %v109 = vmul.f32 %v108, 0.6931472
    %v110 = vmul.f32 -0.5, %v104
    %v111 = vadd.f32 %v110, 1.0
    %v112 = vmul.f32 %v111, %v104
    %v113 = vand.u32 2147483647, %v104
    %vm114 = vcmp.lt.f32.partialorder %v113, 0.0004427343
    %v115 = vsel %vm114, %v112, %v109
    %v116 = vadd.f32 %v106, 1.0
    %v117 = vlog2.pop %v116
    %v118 = vmul.f32 %v117, 0.6931472
    %v119 = vmul.f32 -0.5, %v106
    %v120 = vadd.f32 %v119, 1.0
    %v121 = vmul.f32 %v120, %v106
    %v122 = vand.u32 2147483647, %v106
    %vm123 = vcmp.lt.f32.partialorder %v122, 0.0004427343
    %v124 = vsel %vm123, %v121, %v118
    %v125 = vadd.f32 %v97, %v115
    %v126 = vadd.f32 %v98, %v124
    %v127 = vmul.f32 %v77, %v34
    %v128 = vmul.f32 %v92, %v35
    %v129 = vsub.f32 1.0, %v77
    %v130 = vsub.f32 1.0, %v92
    %v131 = vsub.f32 1.0, %v34
    %v132 = vsub.f32 1.0, %v35
    %v133 = vmul.f32 %v129, %v131
    %v134 = vmul.f32 %v130, %v132
    %v135 = vadd.f32 %v127, %v133
    %v136 = vadd.f32 %v128, %v134
    %v137 = vsub.f32 1.0, %v135
    %v138 = vsub.f32 1.0, %v136
    %v139 = vmul.f32 %v137, %v137
    %v140 = vmul.f32 %v138, %v138
    %v141 = vmul.f32 %v125, %v139
    %v142 = vmul.f32 %v126, %v140
    %v143 = vmul.f32 %v34, 0.25
    %v144 = vmul.f32 %v35, 0.25
    %v145 = vmul.f32 %v131, 0.75
    %v146 = vmul.f32 %v132, 0.75
    %v147 = vadd.f32 %v143, %v145
    %v148 = vadd.f32 %v144, %v146
    %v149 = vmul.f32 %v147, %v141
    %v150 = vmul.f32 %v148, %v142
    %v151 = vmul.f32 %v149, %v53
    %v152 = vmul.f32 %v150, %v54
    %s153 = sld [smem:[#allocation2]]
    %v154 = vadd.f32 %v151, %v152
    %155 = vadd.xlane.f32.xlu0 %v154
    %v156 = vpop.xlane.xlu0 %155
    %v157 = vrot.slane %v156, 4
    %v158 = vadd.f32 %v156, %v157
    %v159 = vrot.slane %v158, 2
    %v160 = vadd.f32 %v158, %v159
    %v161 = vrot.slane %v160, 1
    %v162 = vadd.f32 %v160, %v161
    %s163 = vtos %v162
    %s164 = sadd.f32 %s153, %s163
    %s165 = scalar_lea.smem [#allocation2], 0
    %166 = sst [smem:[%s165]] %s164
    // Predicated region
    $region14: #{tpu_custom_call.1} parent=1 // pred_check
      _
    $region15: #{tpu_custom_call.1} parent=1 // pred_check_branch
      %168 = sbr.rel (0) target = $region17
    $region16: #{tpu_custom_call.1} parent=1 // pred_region
      %170 = vsyncadd [#allocation3], 0
      %s172 = sshll.u32 %s2, 4
      %s173 = int_to_ptr.hbm [resolvable:$true] %s172
      %175 = dma.smem_to_hbm [#allocation2], 16, %s173, [#allocation3]
    $region17: #{tpu_custom_call.1} parent=1 // pred_fallthru
      _
    // Predicated region
    $region18: #{tpu_custom_call.1} parent=1 // pred_check
      _
    $region19: #{tpu_custom_call.1} parent=1 // pred_check_branch
      %177 = sbr.rel (0) target = $region21
    $region20: #{tpu_custom_call.1} parent=1 // pred_region
      %179 = dma.done [#allocation3], 16
    $region21: #{tpu_custom_call.1} parent=1 // pred_fallthru
      _
    %180 = sfence
    %181 = vsyncpa [#allocation3], 1

</llo_original>
